<compile_context>
chip_gen: v5e
topology: v5e:2x2
jax: 0.10.0
libtpu: 0.0.40
codegen_flags: <defaults>
</compile_context>

<pallas_src>
import jax
import jax.numpy as jnp
from jax.experimental import pallas as pl
from jax.experimental.pallas import tpu as pltpu


def _round_up(x: int, m: int) -> int:
    return ((x + m - 1) // m) * m


def value_net_kernel(obs_ref, w1_ref, b1_ref, w2_ref, b2_ref, out_ref):
    # obs_ref: (TB, obs_dim)   w1_ref: (obs_dim, hidden)
    # b1_ref:  (1, hidden)     w2_ref: (1, hidden)
    # b2_ref:  (1, 1) scalar in SMEM
    # out_ref: (1, TB) lane-dense row of V(s) values for this batch tile.
    x = obs_ref[...]
    # First linear layer on the MXU; accumulate in f32 regardless of input dtype.
    h = jnp.dot(x, w1_ref[...], preferred_element_type=jnp.float32)
    h = jnp.maximum(h + b1_ref[...], 0.0)  # bias + ReLU on the VPU, in f32
    # Second linear layer (hidden -> 1): contract hidden against the transposed
    # activation tile so the result lands lane-major as (1, TB) -> unmasked,
    # full-lane output store instead of TB/8 masked single-lane stores.
    v = jnp.dot(w2_ref[...], h.T, preferred_element_type=jnp.float32)
    out_ref[...] = v + b2_ref[0, 0]


def value_net_forward(obs, w1, b1, w2, b2, *, block_b=2048, use_bf16=False):
    """obs: [B, obs_dim] -> [B, 1] f32, V(s) per sample.

    w1: [obs_dim, hidden]; b1: [hidden] or [1, hidden];
    w2: [hidden, 1] / [1, hidden] / [hidden]; b2: any scalar-shaped array.
    """
    B, obs_dim = obs.shape
    hidden = w1.shape[1]

    b1_row = jnp.asarray(b1, jnp.float32).reshape(1, hidden)
    w2_row = jnp.asarray(w2, jnp.float32).reshape(1, hidden)
    b2_s = jnp.asarray(b2, jnp.float32).reshape(1, 1)

    if use_bf16:
        # Large-batch inference is HBM-bound on the obs stream; bf16 halves it.
        # The MXU accumulates in f32 (preferred_element_type) and all elementwise
        # work stays f32 (v5e's VPU/EUP have no bf16).
        obs = obs.astype(jnp.bfloat16)
        w1 = w1.astype(jnp.bfloat16)

    # Batch tile: multiple of 128 (full MXU M passes, 128-aligned lane-dense out
    # row). Whole padded batch when it is small; otherwise ~block_b rows per tile.
    TB = min(_round_up(B, 128), _round_up(block_b, 128))
    Bp = _round_up(B, TB)
    if Bp != B:
        obs = jnp.pad(obs, ((0, Bp - B), (0, 0)))
    grid = (Bp // TB,)

    out_row = pl.pallas_call(
        value_net_kernel,
        out_shape=jax.ShapeDtypeStruct((1, Bp), jnp.float32),
        grid=grid,
        in_specs=[
            # Batch-tiled obs stream (double-buffered HBM->VMEM pipeline).
            pl.BlockSpec((TB, obs_dim), lambda i: (i, 0)),
            # Weights/biases: constant index_map -> VMEM-resident across the grid.
            pl.BlockSpec((obs_dim, hidden), lambda i: (0, 0)),
            pl.BlockSpec((1, hidden), lambda i: (0, 0)),
            pl.BlockSpec((1, hidden), lambda i: (0, 0)),
            # b2 scalar lives in SMEM (no padded VMEM tile / DMA descriptor).
            pl.BlockSpec(memory_space=pltpu.MemorySpace.SMEM),
        ],
        out_specs=pl.BlockSpec((1, TB), lambda i: (0, i)),
        compiler_params=pltpu.CompilerParams(
            # Batch tiles are independent -> shard across both TCs on v7x;
            # harmless on single-TC v5e/v6e.
            dimension_semantics=("parallel",),
        ),
    )(obs, w1, b1_row, w2_row, b2_s)

    # Lane-dense (1, Bp) row back to [B, 1].
    return out_row.reshape(Bp, 1)[:B]


def init_value_net_params(key, obs_dim, hidden_dim=128):
    """Deterministic init mimicking PyTorch nn.Linear default (U[-1/sqrt(fan_in), +])."""
    k1, k2, k3, k4 = jax.random.split(key, 4)
    bound1 = 1.0 / jnp.sqrt(obs_dim)
    bound2 = 1.0 / jnp.sqrt(hidden_dim)
    # Stored as [in, out] (transposed vs PyTorch's [out, in]) for direct matmul.
    w1 = jax.random.uniform(k1, (obs_dim, hidden_dim), jnp.float32, -bound1, bound1)
    b1 = jax.random.uniform(k2, (1, hidden_dim), jnp.float32, -bound1, bound1)
    w2 = jax.random.uniform(k3, (hidden_dim, 1), jnp.float32, -bound2, bound2)
    b2 = jax.random.uniform(k4, (1, 1), jnp.float32, -bound2, bound2)
    return w1, b1, w2, b2


if __name__ == "__main__":
    key = jax.random.PRNGKey(0)
    k_obs1, k_obs2, k_params = jax.random.split(key, 3)

    obs_dim = 16
    hidden_dim = 128
    w1, b1, w2, b2 = init_value_net_params(k_params, obs_dim, hidden_dim)

    def reference(o):
        return jnp.maximum(o @ w1 + b1, 0.0) @ w2 + b2

    # Case 1: small batch (single tile, padded batch).
    obs_small = jax.random.normal(k_obs1, (8, obs_dim), dtype=jnp.float32)
    out_small = value_net_forward(obs_small, w1, b1, w2, b2)
    jax.block_until_ready(out_small)
    assert out_small.shape == (8, 1)
    assert jnp.allclose(out_small, reference(obs_small), atol=1e-4, rtol=1e-4)

    # Case 2: multi-tile grid (exercises batch tiling, resident weights, padding).
    obs_big = jax.random.normal(k_obs2, (300, obs_dim), dtype=jnp.float32)
    out_big = value_net_forward(obs_big, w1, b1, w2, b2, block_b=128)
    jax.block_until_ready(out_big)
    assert out_big.shape == (300, 1)
    assert jnp.allclose(out_big, reference(obs_big), atol=1e-4, rtol=1e-4)

    print("KERNEL_OK")
</pallas_src>

<mosaic_0001>
module attributes {stable_mosaic.version = 11 : i64} {
  func.func @value_net_kernel(%arg0: i32, %arg1: memref<128x16xf32, #tpu.memory_space<vmem>>, %arg2: memref<16x128xf32, #tpu.memory_space<vmem>>, %arg3: memref<1x128xf32, #tpu.memory_space<vmem>>, %arg4: memref<1x128xf32, #tpu.memory_space<vmem>>, %arg5: memref<1x1xf32, #tpu.memory_space<smem>>, %arg6: memref<1x128xf32, #tpu.memory_space<vmem>>) attributes {dimension_semantics = [#tpu.dimension_semantics<parallel>], iteration_bounds = array<i64: 1>, scalar_prefetch = 0 : i64, scratch_operands = 0 : i64, tpu.core_type = #tpu.core_type<tc>, window_params = [{transform_indices = @transform_0, window_bounds = array<i64: 128, 16>}, {pipeline_mode = #tpu.pipeline_mode<synchronous>, transform_indices = @transform_1, window_bounds = array<i64: 16, 128>}, {pipeline_mode = #tpu.pipeline_mode<synchronous>, transform_indices = @transform_2, window_bounds = array<i64: 1, 128>}, {pipeline_mode = #tpu.pipeline_mode<synchronous>, transform_indices = @transform_3, window_bounds = array<i64: 1, 128>}, {transform_indices = @transform_4, window_bounds = array<i64: 1, 1>}, {transform_indices = @transform_5, window_bounds = array<i64: 1, 128>}]} {
    %c0 = arith.constant 0 : index
    %c0_0 = arith.constant 0 : index
    %0 = vector.load %arg1[%c0, %c0_0] : memref<128x16xf32, #tpu.memory_space<vmem>>, vector<128x16xf32>
    %c0_1 = arith.constant 0 : index
    %c0_2 = arith.constant 0 : index
    %1 = vector.load %arg2[%c0_1, %c0_2] : memref<16x128xf32, #tpu.memory_space<vmem>>, vector<16x128xf32>
    %cst = arith.constant dense<0.000000e+00> : vector<128x128xf32>
    %2 = tpu.matmul %0, %1, %cst {dimension_numbers = #tpu.dot_dimension_numbers<[1], [0], [0], [1], [0, 0, 1, 1], [], []>} : vector<128x16xf32>, vector<16x128xf32>, vector<128x128xf32> -> vector<128x128xf32>
    %c0_3 = arith.constant 0 : index
    %c0_4 = arith.constant 0 : index
    %3 = vector.load %arg3[%c0_3, %c0_4] : memref<1x128xf32, #tpu.memory_space<vmem>>, vector<1x128xf32>
    %4 = vector.broadcast %3 : vector<1x128xf32> to vector<128x128xf32>
    %5 = arith.addf %2, %4 : vector<128x128xf32>
    %cst_5 = arith.constant 0.000000e+00 : f32
    %6 = vector.broadcast %cst_5 : f32 to vector<128x128xf32>
    %7 = arith.maximumf %5, %6 : vector<128x128xf32>
    %c0_6 = arith.constant 0 : index
    %c0_7 = arith.constant 0 : index
    %8 = vector.load %arg4[%c0_6, %c0_7] : memref<1x128xf32, #tpu.memory_space<vmem>>, vector<1x128xf32>
    %9 = tpu.transpose %7, [1, 0] : vector<128x128xf32> -> vector<128x128xf32>
    %cst_8 = arith.constant dense<0.000000e+00> : vector<1x128xf32>
    %10 = tpu.matmul %8, %9, %cst_8 {dimension_numbers = #tpu.dot_dimension_numbers<[1], [0], [0], [1], [0, 0, 1, 1], [], []>} : vector<1x128xf32>, vector<128x128xf32>, vector<1x128xf32> -> vector<1x128xf32>
    %c0_9 = arith.constant 0 : index
    %c0_10 = arith.constant 0 : index
    %11 = memref.load %arg5[%c0_9, %c0_10] : memref<1x1xf32, #tpu.memory_space<smem>>
    %12 = vector.broadcast %11 : f32 to vector<1x128xf32>
    %13 = arith.addf %10, %12 : vector<1x128xf32>
    %c0_11 = arith.constant 0 : index
    %c0_12 = arith.constant 0 : index
    %14 = vector.load %arg6[%c0_11, %c0_12] : memref<1x128xf32, #tpu.memory_space<vmem>>, vector<1x128xf32>
    tpu.vector_store %arg6[%c0_11, %c0_12], %13 {strides = array<i32>} : memref<1x128xf32, #tpu.memory_space<vmem>>, vector<1x128xf32>,
    return
  }
  func.func @transform_0(%arg0: i32) -> (i32, i32) {
    %c0_i32 = arith.constant 0 : i32
    %c0_i32_0 = arith.constant 0 : i32
    return %arg0, %c0_i32 : i32, i32
  }
  func.func @transform_1(%arg0: i32) -> (i32, i32) {
    %c0_i32 = arith.constant 0 : i32
    %c0_i32_0 = arith.constant 0 : i32
    %c0_i32_1 = arith.constant 0 : i32
    return %c0_i32, %c0_i32_0 : i32, i32
  }
  func.func @transform_2(%arg0: i32) -> (i32, i32) {
    %c0_i32 = arith.constant 0 : i32
    %c0_i32_0 = arith.constant 0 : i32
    %c0_i32_1 = arith.constant 0 : i32
    return %c0_i32, %c0_i32_0 : i32, i32
  }
  func.func @transform_3(%arg0: i32) -> (i32, i32) {
    %c0_i32 = arith.constant 0 : i32
    %c0_i32_0 = arith.constant 0 : i32
    %c0_i32_1 = arith.constant 0 : i32
    return %c0_i32, %c0_i32_0 : i32, i32
  }
  func.func @transform_4(%arg0: i32) -> (i32, i32) {
    %c0_i32 = arith.constant 0 : i32
    %c0_i32_0 = arith.constant 0 : i32
    %c0_i32_1 = arith.constant 0 : i32
    return %c0_i32, %c0_i32_0 : i32, i32
  }
  func.func @transform_5(%arg0: i32) -> (i32, i32) {
    %c0_i32 = arith.constant 0 : i32
    %c0_i32_0 = arith.constant 0 : i32
    return %c0_i32, %arg0 : i32, i32
  }
}

</mosaic_0001>

<llo_original>
// kernel: tpu_custom_call.1
$region0: #{tpu_custom_call.1}
  #allocation0 [shape = 'u32[]', space=smem, size = 0x4, offset = 0x4, fixed_abs, tag = 'smem constant byte address 0x4 - core index']
  #allocation1 [shape = 'u32[72,128]{1,0:T(1,128)}', space=vmem, size = 0x9000, scoped, tag = 'internal scratch']
  #allocation2 [shape = 'f32[1,1]{1,0:T(1,128)S(6)}', space=smem, size = 0x200, scoped, tag = 'scoped memory for tpu_custom_call.1']
  %s0 = inlined_call_operand.vmem [shape: f32[128,16], index: 0, kind: input, shape index: {}]
  %s1 = inlined_call_operand.vmem [shape: f32[16,128], index: 1, kind: input, shape index: {}]
  %s2 = inlined_call_operand.vmem [shape: f32[1,128], index: 2, kind: input, shape index: {}]
  %s3 = inlined_call_operand.vmem [shape: f32[1,128], index: 3, kind: input, shape index: {}]
  %s4 = inlined_call_operand.<no memory space> [shape: f32[1,1], index: 4, kind: input, shape index: {}]
  %s5 = inlined_call_operand.hbm [shape: f32[1,128], index: 5, kind: output, shape index: {}]
  %s6 = sld [smem:[#allocation0]]
  $region30: #{tpu_custom_call.1} parent=0
    _
  %s8 = ssub.s32 1, %s6
  %s9 = scalar_select 0, %s8, %s6
  %10 = sst [smem:[#allocation2]] %s4
  $region1: #{tpu_custom_call.1} parent=0
    #allocation3 [shape = 'u8[512]{0}', space=vmem, size = 0x400, scoped, tag = 'output window, operand 0, single buffered']
    #allocation4 [shape = 's32[1]{0}', space=sflag, size = 0x4, scoped, tag = 'scoped memory for tpu_custom_call.1']
    %11 = vsyncpa [#allocation4], 0
    // Predicated region
    $region2: #{tpu_custom_call.1} parent=1 // pred_check
      _
    $region3: #{tpu_custom_call.1} parent=1 // pred_check_branch
      %13 = sbr.rel (0) target = $region5
    $region4: #{tpu_custom_call.1} parent=1 // pred_region
      _
    $region5: #{tpu_custom_call.1} parent=1 // pred_fallthru
      _
    // Predicated region
    $region6: #{tpu_custom_call.1} parent=1 // pred_check
      _
    $region7: #{tpu_custom_call.1} parent=1 // pred_check_branch
      %15 = sbr.rel (0) target = $region9
    $region8: #{tpu_custom_call.1} parent=1 // pred_region
      _
    $region9: #{tpu_custom_call.1} parent=1 // pred_fallthru
      _
    // Predicated region
    $region10: #{tpu_custom_call.1} parent=1 // pred_check
      _
    $region11: #{tpu_custom_call.1} parent=1 // pred_check_branch
      %17 = sbr.rel (0) target = $region13
    $region12: #{tpu_custom_call.1} parent=1 // pred_region
      _
    $region13: #{tpu_custom_call.1} parent=1 // pred_fallthru
      _
    // Predicated region
    $region14: #{tpu_custom_call.1} parent=1 // pred_check
      _
    $region15: #{tpu_custom_call.1} parent=1 // pred_check_branch
      %19 = sbr.rel (0) target = $region17
    $region16: #{tpu_custom_call.1} parent=1 // pred_region
      _
    $region17: #{tpu_custom_call.1} parent=1 // pred_fallthru
      _
    // Predicated region
    $region18: #{tpu_custom_call.1} parent=1 // pred_check
      _
    $region19: #{tpu_custom_call.1} parent=1 // pred_check_branch
      %21 = sbr.rel (0) target = $region21
    $region20: #{tpu_custom_call.1} parent=1 // pred_region
      _
    $region21: #{tpu_custom_call.1} parent=1 // pred_fallthru
      _
    %v22 = vld [vmem:[%s0] sm:$0xff]
    %v23 = vld [vmem:[%s0 + $0x8] sm:$0xff]
    %v24 = vld [vmem:[%s0 + $0x10] sm:$0xff]
    %v25 = vld [vmem:[%s0 + $0x18] sm:$0xff]
    %v26 = vld [vmem:[%s0 + $0x20] sm:$0xff]
    %v27 = vld [vmem:[%s0 + $0x28] sm:$0xff]
    %v28 = vld [vmem:[%s0 + $0x30] sm:$0xff]
    %v29 = vld [vmem:[%s0 + $0x38] sm:$0xff]
    %v30 = vld [vmem:[%s0 + $0x40] sm:$0xff]
    %v31 = vld [vmem:[%s0 + $0x48] sm:$0xff]
    %v32 = vld [vmem:[%s0 + $0x50] sm:$0xff]
    %v33 = vld [vmem:[%s0 + $0x58] sm:$0xff]
    %v34 = vld [vmem:[%s0 + $0x60] sm:$0xff]
    %v35 = vld [vmem:[%s0 + $0x68] sm:$0xff]
    %v36 = vld [vmem:[%s0 + $0x70] sm:$0xff]
    %v37 = vld [vmem:[%s0 + $0x78] sm:$0xff]
    %v38 = vld [vmem:[%s1] sm:$0xff]
    %v39 = vld [vmem:[%s1 + $0x8] sm:$0xff]
    %v40 = vld [vmem:[%s2] sm:$0x1]
    %v42 = vperm.slane %v40, 0
    %vm44 = vcmask 130048
    %v46 = vsel %vm44, %v22, 0
    %v49 = vsel %vm44, %v23, 0
    %v52 = vsel %vm44, %v24, 0
    %v55 = vsel %vm44, %v25, 0
    %v58 = vsel %vm44, %v26, 0
    %v61 = vsel %vm44, %v27, 0
    %v64 = vsel %vm44, %v28, 0
    %v67 = vsel %vm44, %v29, 0
    %v70 = vsel %vm44, %v30, 0
    %v73 = vsel %vm44, %v31, 0
    %v76 = vsel %vm44, %v32, 0
    %v79 = vsel %vm44, %v33, 0
    %v82 = vsel %vm44, %v34, 0
    %v85 = vsel %vm44, %v35, 0
    %v88 = vsel %vm44, %v36, 0
    %v91 = vsel %vm44, %v37, 0
    %93 = vmatpush.msra.mxu0 0.0
    %94 = vmatpush.msra.mxu0 0.0
    %95 = vmatpush.msra.mxu0 0.0
    %96 = vmatpush.msra.mxu0 0.0
    %97 = vmatpush.msra.mxu0 0.0
    %98 = vmatpush.msra.mxu0 0.0
    %99 = vmatpush.msra.mxu0 0.0
    %100 = vmatpush.msra.mxu0 0.0
    %101 = vmatpush.msra.mxu0 0.0
    %102 = vmatpush.msra.mxu0 0.0
    %103 = vmatpush.msra.mxu0 0.0
    %104 = vmatpush.msra.mxu0 0.0
    %105 = vmatpush.msra.mxu0 0.0
    %106 = vmatpush.msra.mxu0 0.0
    %107 = vmatpush.msra.mxu0 %v39
    %108 = vmatpush.msra.mxu0 %v38
    %109 = vmatmul.f32.gmra.mxu0 %v46
    %v110 = vpop.f32.mrf.mxu0
    %v111 = vadd.f32 %v42, %v110
    %112 = vmatmul.f32.gmra.mxu0 %v49
    %v113 = vpop.f32.mrf.mxu0
    %v114 = vadd.f32 %v42, %v113
    %115 = vmatmul.f32.gmra.mxu0 %v52
    %v116 = vpop.f32.mrf.mxu0
    %v117 = vadd.f32 %v42, %v116
    %118 = vmatmul.f32.gmra.mxu0 %v55
    %v119 = vpop.f32.mrf.mxu0
    %v120 = vadd.f32 %v42, %v119
    %121 = vmatmul.f32.gmra.mxu0 %v58
    %v122 = vpop.f32.mrf.mxu0
    %v123 = vadd.f32 %v42, %v122
    %124 = vmatmul.f32.gmra.mxu0 %v61
    %v125 = vpop.f32.mrf.mxu0
    %v126 = vadd.f32 %v42, %v125
    %127 = vmatmul.f32.gmra.mxu0 %v64
    %v128 = vpop.f32.mrf.mxu0
    %v129 = vadd.f32 %v42, %v128
    %130 = vmatmul.f32.gmra.mxu0 %v67
    %v131 = vpop.f32.mrf.mxu0
    %v132 = vadd.f32 %v42, %v131
    %133 = vmatmul.f32.gmra.mxu0 %v70
    %v134 = vpop.f32.mrf.mxu0
    %v135 = vadd.f32 %v42, %v134
    %136 = vmatmul.f32.gmra.mxu0 %v73
    %v137 = vpop.f32.mrf.mxu0
    %v138 = vadd.f32 %v42, %v137
    %139 = vmatmul.f32.gmra.mxu0 %v76
    %v140 = vpop.f32.mrf.mxu0
    %v141 = vadd.f32 %v42, %v140
    %142 = vmatmul.f32.gmra.mxu0 %v79
    %v143 = vpop.f32.mrf.mxu0
    %v144 = vadd.f32 %v42, %v143
    %145 = vmatmul.f32.gmra.mxu0 %v82
    %v146 = vpop.f32.mrf.mxu0
    %v147 = vadd.f32 %v42, %v146
    %148 = vmatmul.f32.gmra.mxu0 %v85
    %v149 = vpop.f32.mrf.mxu0
    %v150 = vadd.f32 %v42, %v149
    %151 = vmatmul.f32.gmra.mxu0 %v88
    %v152 = vpop.f32.mrf.mxu0
    %v153 = vadd.f32 %v42, %v152
    %154 = vmatmul.f32.gmra.mxu0 %v91
    %v155 = vpop.f32.mrf.mxu0
    %v156 = vadd.f32 %v42, %v155
    %157 = vdwg.mxu0
    %v158 = vmax.f32 %v111, 0.0
    %v159 = vmax.f32 %v114, 0.0
    %v160 = vmax.f32 %v117, 0.0
    %v161 = vmax.f32 %v120, 0.0
    %v162 = vmax.f32 %v123, 0.0
    %v163 = vmax.f32 %v126, 0.0
    %v164 = vmax.f32 %v129, 0.0
    %v165 = vmax.f32 %v132, 0.0
    %v166 = vmax.f32 %v135, 0.0
    %v167 = vmax.f32 %v138, 0.0
    %v168 = vmax.f32 %v141, 0.0
    %v169 = vmax.f32 %v144, 0.0
    %v170 = vmax.f32 %v147, 0.0
    %v171 = vmax.f32 %v150, 0.0
    %v172 = vmax.f32 %v153, 0.0
    %v173 = vmax.f32 %v156, 0.0
    %v174 = vld [vmem:[%s3] sm:$0x1]
    %s175 = sld [smem:[#allocation2]]
    %v176 = vstv %s175
    %177 = vmatpush.xpose.msra.mxu0 %v173
    %178 = vmatpush.xpose.msra.mxu0 %v172
    %179 = vmatpush.xpose.msra.mxu0 %v171
    %180 = vmatpush.xpose.msra.mxu0 %v170
    %181 = vmatpush.xpose.msra.mxu0 %v169
    %182 = vmatpush.xpose.msra.mxu0 %v168
    %183 = vmatpush.xpose.msra.mxu0 %v167
    %184 = vmatpush.xpose.msra.mxu0 %v166
    %185 = vmatpush.xpose.msra.mxu0 %v165
    %186 = vmatpush.xpose.msra.mxu0 %v164
    %187 = vmatpush.xpose.msra.mxu0 %v163
    %188 = vmatpush.xpose.msra.mxu0 %v162
    %189 = vmatpush.xpose.msra.mxu0 %v161
    %190 = vmatpush.xpose.msra.mxu0 %v160
    %191 = vmatpush.xpose.msra.mxu0 %v159
    %192 = vmatpush.xpose.msra.mxu0 %v158
    %193 = vmatmul.f32.gmra.mxu0 %v174
    %v194 = vpop.f32.mrf.mxu0
    %v195 = vadd.f32 %v176, %v194
    %196 = vdwg.mxu0
    %197 = vst [vmem:[#allocation3] sm:$0x1] %v195
    // Predicated region
    $region22: #{tpu_custom_call.1} parent=1 // pred_check
      _
    $region23: #{tpu_custom_call.1} parent=1 // pred_check_branch
      %199 = sbr.rel (0) target = $region25
    $region24: #{tpu_custom_call.1} parent=1 // pred_region
      %201 = vsyncadd [#allocation4], 0
      %s203 = sshll.u32 [#allocation3], 4
      %s204 = int_to_ptr.vmem [resolvable:$true] %s203
      %s205 = sshll.u32 %s5, 4
      %s206 = int_to_ptr.hbm [resolvable:$true] %s205
      %208 = dma.vmem_to_hbm [thread:$0]  %s204, 16, %s206, [#allocation4]
    $region25: #{tpu_custom_call.1} parent=1 // pred_fallthru
      _
    // Predicated region
    $region26: #{tpu_custom_call.1} parent=1 // pred_check
      _
    $region27: #{tpu_custom_call.1} parent=1 // pred_check_branch
      %210 = sbr.rel (0) target = $region29
    $region28: #{tpu_custom_call.1} parent=1 // pred_region
      %212 = dma.done [#allocation4], 16
    $region29: #{tpu_custom_call.1} parent=1 // pred_fallthru
      _
    %213 = vsyncpa [#allocation4], 1

</llo_original>
